<compile_context>
chip_gen: v7x
topology: tpu7x:2x2x1
jax: 0.10.0
libtpu: 0.0.40
codegen_flags: <defaults>
</compile_context>

<pallas_src>
import functools

import jax
import jax.numpy as jnp
from jax import lax
from jax.experimental import pallas as pl
from jax.experimental.pallas import tpu as pltpu


def _round_up(x, m):
    return ((x + m - 1) // m) * m


def _cdiv(a, b):
    return (a + b - 1) // b


def _sublane(dtype):
    b = jnp.dtype(dtype).itemsize
    return 8 if b >= 4 else (16 if b == 2 else 32)


def _num_tensorcores():
    # v7x has 2 TensorCores per chip; v5e/v6e have 1.
    try:
        kind = jax.devices()[0].device_kind.lower()
        if "v7" in kind or "7x" in kind:
            return 2
    except Exception:
        pass
    return 1


def _vmem_capacity():
    try:
        return int(pltpu.get_tpu_info().vmem_capacity_bytes)
    except Exception:
        return 64 * 1024 * 1024          # conservative (v7x-sized)


# ---------------------------------------------------------------------------
# Kernels
# ---------------------------------------------------------------------------
def _resident_kernel(x_ref, w_ref, b_ref, o_ref, *, act, cdtype):
    """Weight-resident path: W/bias have constant block index (fetched once);
    the grid streams x row-blocks.  x is cast to the MXU feed dtype here."""
    x = x_ref[...]
    if x.dtype != cdtype:
        x = x.astype(cdtype)
    out = jnp.dot(x, w_ref[...], preferred_element_type=jnp.float32)
    out = out + b_ref[...]                        # f32 bias row broadcasts
    if act:
        out = jnp.maximum(out, 0.0)
    o_ref[...] = out.astype(o_ref.dtype)


def _tiled_kernel(x_ref, w_ref, b_ref, o_ref, acc_ref, *, act, cdtype, k_dim, tk):
    """(M, N, K)-tiled path with an f32 VMEM accumulator across the K axis."""
    k = pl.program_id(2)

    @pl.when(k == 0)
    def _():
        acc_ref[...] = jnp.zeros_like(acc_ref)

    x = x_ref[...]
    w = w_ref[...]
    if k_dim % tk != 0:
        # Last K block extends past K: its padded region holds unspecified
        # data, so zero both operands' K remainder before accumulating.
        k0 = k * tk
        xcol = lax.broadcasted_iota(jnp.int32, x.shape, 1) + k0
        x = jnp.where(xcol < k_dim, x, jnp.zeros((), x.dtype))
        wrow = lax.broadcasted_iota(jnp.int32, w.shape, 0) + k0
        w = jnp.where(wrow < k_dim, w, jnp.zeros((), w.dtype))
    if x.dtype != cdtype:
        x = x.astype(cdtype)

    acc_ref[...] += jnp.dot(x, w, preferred_element_type=jnp.float32)

    @pl.when(k == pl.num_programs(2) - 1)
    def _():
        out = acc_ref[...] + b_ref[...]
        if act:
            out = jnp.maximum(out, 0.0)
        o_ref[...] = out.astype(o_ref.dtype)


# ---------------------------------------------------------------------------
# Wrapper
# ---------------------------------------------------------------------------
def perceptron_forward(
    x,
    weight,
    bias,
    *,
    act=True,
    compute_dtype=None,     # default: bf16 MXU feed for f32 inputs
    tm=None,
    tn=None,
    tk=None,
    allow_resident=True,
    vmem_budget_bytes=None,
):
    """y = relu(x @ weight + bias) via a Pallas TPU kernel."""
    M, K = x.shape
    Kw, N = weight.shape
    assert K == Kw and bias.shape == (N,)

    out_dtype = x.dtype
    xbytes = jnp.dtype(x.dtype).itemsize
    obytes = jnp.dtype(out_dtype).itemsize

    # bf16 MXU feed by default (all generations are bf16-native); accumulation
    # stays f32 via preferred_element_type.
    if compute_dtype is None:
        cdtype = jnp.dtype(jnp.bfloat16) if x.dtype == jnp.float32 else jnp.dtype(x.dtype)
    else:
        cdtype = jnp.dtype(compute_dtype)
    cbytes = cdtype.itemsize

    # Weight/bias are small: pre-cast them once.  x (the large operand) is
    # streamed raw and cast tile-by-tile inside the kernel -- no extra HBM pass.
    wc = weight if weight.dtype == cdtype else weight.astype(cdtype)
    b2 = bias.astype(jnp.float32).reshape(1, N)

    sub = _sublane(x.dtype)
    num_tc = _num_tensorcores()
    vmem_cap = _vmem_capacity()
    big_vmem = vmem_cap >= (96 << 20)            # v5e/v6e: 128 MiB; v7x: 64 MiB
    if vmem_budget_bytes is None:
        if big_vmem:
            vmem_budget_bytes = int(0.8 * vmem_cap) - (8 << 20)
        else:
            vmem_budget_bytes = vmem_cap // 2 - (4 << 20)
    tile_cap = 512 if big_vmem else 256

    n_lanes = _round_up(N, 128)
    slack = 2 << 20

    # ------------------- Path A: weight resident in VMEM -------------------
    def resident_fp(tm_):
        return (2 * tm_ * K * xbytes             # x tile (double buffered)
                + 2 * K * N * cbytes             # resident weight
                + 2 * 8 * n_lanes * 4            # bias row (sublane padded)
                + 2 * tm_ * N * obytes           # output tile (double buffered)
                + slack)

    use_resident = (allow_resident and tn is None and tk is None
                    and resident_fp(sub) <= vmem_budget_bytes)

    if use_resident:
        if tm is None:
            tm_ = min(tile_cap, _round_up(M, sub))
            if num_tc > 1 and _cdiv(M, tm_) < num_tc and M > sub:
                tm_ = max(sub, _round_up(_cdiv(M, num_tc), sub))   # feed both TCs
            while tm_ > sub and resident_fp(tm_) > vmem_budget_bytes:
                tm_ = max(sub, _round_up(tm_ // 2, sub))
        else:
            tm_ = tm
        grid = (_cdiv(M, tm_),)
        kernel = functools.partial(_resident_kernel, act=act, cdtype=cdtype)
        in_specs = [
            pl.BlockSpec((tm_, K), lambda i: (i, 0)),    # x row block
            pl.BlockSpec((K, N), lambda i: (0, 0)),      # whole W, fetched once
            pl.BlockSpec((1, N), lambda i: (0, 0)),      # whole bias, fetched once
        ]
        out_specs = pl.BlockSpec((tm_, N), lambda i: (i, 0))
        scratch_shapes = []
        dims = ("parallel",)
        footprint = resident_fp(tm_)
        bytes_accessed = M * K * xbytes + K * N * cbytes + N * 4 + M * N * obytes
    else:
        # --------------- Path B: (M, N, K) tiled, f32 accumulator ---------------
        tm_ = tm if tm is not None else min(tile_cap, _round_up(M, sub))
        tn_ = tn if tn is not None else min(tile_cap, _round_up(N, 128))
        if (tm is None and num_tc > 1 and M > sub
                and _cdiv(M, tm_) * _cdiv(N, tn_) < num_tc):
            tm_ = max(sub, _round_up(_cdiv(M, num_tc), sub))       # split M, not N

        def tiled_fp(tk_):
            return (2 * tm_ * tk_ * xbytes + 2 * tk_ * tn_ * cbytes
                    + 2 * 8 * tn_ * 4 + 2 * tm_ * tn_ * obytes
                    + tm_ * tn_ * 4 + slack)

        if tk is None:
            fixed = tiled_fp(0)
            per_k = 2 * tm_ * xbytes + 2 * tn_ * cbytes
            tk_ = (max(0, vmem_budget_bytes - fixed) // per_k) // 128 * 128
            tk_ = int(max(128, min(_round_up(K, 128), tk_)))
        else:
            tk_ = tk
        while tiled_fp(tk_) > vmem_budget_bytes and (tm_ > sub or tn_ > 128):
            if tm_ >= tn_ and tm_ > sub:
                tm_ = max(sub, _round_up(tm_ // 2, sub))
            elif tn_ > 128:
                tn_ = max(128, _round_up(tn_ // 2, 128))
            else:
                break

        grid_m, grid_n, grid_k = _cdiv(M, tm_), _cdiv(N, tn_), _cdiv(K, tk_)
        grid = (grid_m, grid_n, grid_k)
        kernel = functools.partial(_tiled_kernel, act=act, cdtype=cdtype,
                                   k_dim=K, tk=tk_)
        in_specs = [
            pl.BlockSpec((tm_, tk_), lambda i, j, k: (i, k)),   # x tile
            pl.BlockSpec((tk_, tn_), lambda i, j, k: (k, j)),   # W tile
            pl.BlockSpec((1, tn_), lambda i, j, k: (0, j)),     # bias tile
        ]
        out_specs = pl.BlockSpec((tm_, tn_), lambda i, j, k: (i, j))
        scratch_shapes = [pltpu.VMEM((tm_, tn_), jnp.float32)]
        dims = ("parallel", "parallel", "arbitrary")
        footprint = tiled_fp(tk_)
        bytes_accessed = (grid_n * M * K * xbytes + grid_m * K * N * cbytes
                          + grid_m * grid_n * tn_ * 4 + M * N * obytes)

    cost = pl.CostEstimate(flops=2 * M * N * K, transcendentals=0,
                           bytes_accessed=int(bytes_accessed))
    vmem_floor = (64 << 20) if big_vmem else (32 << 20)
    vmem_limit = int(min(vmem_cap - (4 << 20),
                         max(vmem_floor, footprint + (8 << 20))))

    return pl.pallas_call(
        kernel,
        out_shape=jax.ShapeDtypeStruct((M, N), out_dtype),
        grid_spec=pltpu.PrefetchScalarGridSpec(
            num_scalar_prefetch=0,
            grid=grid,
            in_specs=in_specs,
            out_specs=out_specs,
            scratch_shapes=scratch_shapes,
        ),
        compiler_params=pltpu.CompilerParams(
            dimension_semantics=dims,
            vmem_limit_bytes=vmem_limit,
        ),
        cost_estimate=cost,
    )(x, wc, b2)


def init_perceptron_params(key, in_dim, out_dim, dtype=jnp.float32):
    """Xavier-uniform weight, zero bias (matches the torch init)."""
    limit = (6.0 / (in_dim + out_dim)) ** 0.5
    weight = jax.random.uniform(
        key, (in_dim, out_dim), dtype=dtype, minval=-limit, maxval=limit
    )
    bias = jnp.zeros((out_dim,), dtype=dtype)
    return weight, bias


if __name__ == "__main__":
    key = jax.random.PRNGKey(0)
    k_x, k_w, k_x2, k_w2 = jax.random.split(key, 4)

    # 1) Small module-scale shape; weight-resident path, f32 feed (tight check).
    batch, in_dim, out_dim = 8, 32, 64
    x = jax.random.normal(k_x, (batch, in_dim), dtype=jnp.float32)
    weight, bias = init_perceptron_params(k_w, in_dim, out_dim)
    y_ref = jnp.maximum(jnp.dot(x, weight, precision="highest") + bias, 0.0)

    y = jax.block_until_ready(
        perceptron_forward(x, weight, bias, act=True, compute_dtype=jnp.float32))
    assert y.shape == (batch, out_dim)
    assert jnp.allclose(y, y_ref, atol=1e-5, rtol=1e-5)

    # 1b) Default bf16 MXU feed (f32 accumulation); loose check.
    yb = jax.block_until_ready(perceptron_forward(x, weight, bias, act=True))
    assert yb.shape == (batch, out_dim)
    assert jnp.allclose(yb, y_ref, atol=2e-1, rtol=2e-2)

    # 2) Non-divisible shape, forced K-tiled accumulator path with in-kernel
    #    K-edge masking and Pallas partial M/N blocks (no host padding).
    M2, K2, N2 = 90, 200, 160
    x2 = jax.random.normal(k_x2, (M2, K2), dtype=jnp.float32)
    w2, b2 = init_perceptron_params(k_w2, K2, N2)
    y2_ref = jnp.maximum(jnp.dot(x2, w2, precision="highest") + b2, 0.0)
    y2 = jax.block_until_ready(
        perceptron_forward(x2, w2, b2, act=True, compute_dtype=jnp.float32,
                           allow_resident=False, tm=32, tn=128, tk=128))
    assert y2.shape == (M2, N2)
    assert jnp.allclose(y2, y2_ref, atol=1e-4, rtol=1e-4)

    # 3) Same tiled path with the default bf16 MXU feed; loose check.
    y3 = jax.block_until_ready(
        perceptron_forward(x2, w2, b2, act=True,
                           allow_resident=False, tm=32, tn=128, tk=128))
    assert y3.shape == (M2, N2)
    assert jnp.allclose(y3, y2_ref, atol=2e-1, rtol=2e-2)

    print("KERNEL_OK")
</pallas_src>

<mosaic_0001>
module attributes {stable_mosaic.version = 11 : i64} {
  func.func @_resident_kernel(%arg0: i32, %arg1: memref<8x32xf32, #tpu.memory_space<vmem>>, %arg2: memref<32x64xf32, #tpu.memory_space<vmem>>, %arg3: memref<1x64xf32, #tpu.memory_space<vmem>>, %arg4: memref<8x64xf32, #tpu.memory_space<vmem>>) attributes {dimension_semantics = [#tpu.dimension_semantics<parallel>], iteration_bounds = array<i64: 1>, scalar_prefetch = 0 : i64, scratch_operands = 0 : i64, tpu.core_type = #tpu.core_type<tc>, window_params = [{transform_indices = @transform_0, window_bounds = array<i64: 8, 32>}, {pipeline_mode = #tpu.pipeline_mode<synchronous>, transform_indices = @transform_1, window_bounds = array<i64: 32, 64>}, {pipeline_mode = #tpu.pipeline_mode<synchronous>, transform_indices = @transform_2, window_bounds = array<i64: 1, 64>}, {transform_indices = @transform_3, window_bounds = array<i64: 8, 64>}]} {
    %c0 = arith.constant 0 : index
    %c0_0 = arith.constant 0 : index
    %0 = vector.load %arg1[%c0, %c0_0] : memref<8x32xf32, #tpu.memory_space<vmem>>, vector<8x32xf32>
    %c0_1 = arith.constant 0 : index
    %c0_2 = arith.constant 0 : index
    %1 = vector.load %arg2[%c0_1, %c0_2] : memref<32x64xf32, #tpu.memory_space<vmem>>, vector<32x64xf32>
    %cst = arith.constant dense<0.000000e+00> : vector<8x64xf32>
    %2 = tpu.matmul %0, %1, %cst {dimension_numbers = #tpu.dot_dimension_numbers<[1], [0], [0], [1], [0, 0, 1, 1], [], []>} : vector<8x32xf32>, vector<32x64xf32>, vector<8x64xf32> -> vector<8x64xf32>
    %c0_3 = arith.constant 0 : index
    %c0_4 = arith.constant 0 : index
    %3 = vector.load %arg3[%c0_3, %c0_4] : memref<1x64xf32, #tpu.memory_space<vmem>>, vector<1x64xf32>
    %4 = vector.broadcast %3 : vector<1x64xf32> to vector<8x64xf32>
    %5 = arith.addf %2, %4 : vector<8x64xf32>
    %cst_5 = arith.constant 0.000000e+00 : f32
    %6 = vector.broadcast %cst_5 : f32 to vector<8x64xf32>
    %7 = arith.maximumf %5, %6 : vector<8x64xf32>
    %c0_6 = arith.constant 0 : index
    %c0_7 = arith.constant 0 : index
    %8 = vector.load %arg4[%c0_6, %c0_7] : memref<8x64xf32, #tpu.memory_space<vmem>>, vector<8x64xf32>
    tpu.vector_store %arg4[%c0_6, %c0_7], %7 {strides = array<i32>} : memref<8x64xf32, #tpu.memory_space<vmem>>, vector<8x64xf32>,
    return
  }
  func.func @transform_0(%arg0: i32) -> (i32, i32) {
    %c0_i32 = arith.constant 0 : i32
    %c0_i32_0 = arith.constant 0 : i32
    return %arg0, %c0_i32 : i32, i32
  }
  func.func @transform_1(%arg0: i32) -> (i32, i32) {
    %c0_i32 = arith.constant 0 : i32
    %c0_i32_0 = arith.constant 0 : i32
    %c0_i32_1 = arith.constant 0 : i32
    return %c0_i32, %c0_i32_0 : i32, i32
  }
  func.func @transform_2(%arg0: i32) -> (i32, i32) {
    %c0_i32 = arith.constant 0 : i32
    %c0_i32_0 = arith.constant 0 : i32
    %c0_i32_1 = arith.constant 0 : i32
    return %c0_i32, %c0_i32_0 : i32, i32
  }
  func.func @transform_3(%arg0: i32) -> (i32, i32) {
    %c0_i32 = arith.constant 0 : i32
    %c0_i32_0 = arith.constant 0 : i32
    return %arg0, %c0_i32 : i32, i32
  }
}

</mosaic_0001>

<llo_original>
// kernel: tpu_custom_call.1
$region0: #{tpu_custom_call.1}
  #allocation0 [shape = 'u32[]', space=smem, size = 0x4, offset = 0x4, fixed_abs, tag = 'smem constant byte address 0x4 - core index']
  #allocation1 [shape = 'u32[144,128]{1,0:T(1,128)}', space=vmem, size = 0x12000, scoped, tag = 'internal scratch']
  %s0 = inlined_call_operand.hbm [shape: f32[8,32], index: 0, kind: input, shape index: {}]
  %s1 = inlined_call_operand.hbm [shape: f32[32,64], index: 1, kind: input, shape index: {}]
  %s2 = inlined_call_operand.vmem [shape: f32[1,64], index: 2, kind: input, shape index: {}]
  %s3 = inlined_call_operand.hbm [shape: f32[8,64], index: 3, kind: output, shape index: {}]
  %s4 = sld [smem:[#allocation0]]
  $region30: #{tpu_custom_call.1} parent=0
    _
  %s6 = ssub.s32 1, %s4
  %s7 = scalar_select 0, %s6, %s4
  $region1: #{tpu_custom_call.1} parent=0
    #allocation2 [shape = 'u8[4096]{0}', space=vmem, size = 0x1000, scoped, tag = 'input window, operand 0, single buffered']
    #allocation3 [shape = 's32[1]{0}', space=sflag, size = 0x4, scoped, tag = 'scoped memory for tpu_custom_call.1']
    #allocation4 [shape = 's32[1]{0}', space=sflag, size = 0x4, scoped, tag = 'scoped memory for tpu_custom_call.1']
    #allocation5 [shape = 'u8[16384]{0}', space=vmem, size = 0x4000, scoped, tag = 'input window, operand 1, single buffered']
    #allocation6 [shape = 's32[1]{0}', space=sflag, size = 0x4, scoped, tag = 'scoped memory for tpu_custom_call.1']
    #allocation7 [shape = 'u8[4096]{0}', space=vmem, size = 0x1000, scoped, tag = 'output window, operand 0, single buffered']
    %8 = vsyncpa [#allocation3], 0
    %9 = vsyncpa [#allocation6], 0
    %10 = vsyncpa [#allocation4], 0
    // Predicated region
    $region2: #{tpu_custom_call.1} parent=1 // pred_check
      _
    $region3: #{tpu_custom_call.1} parent=1 // pred_check_branch
      %12 = sbr.rel (0) target = $region5
    $region4: #{tpu_custom_call.1} parent=1 // pred_region
      %s14 = ssub.s32 128, 128
      %15 = vsyncadd [#allocation3], %s14
      %s17 = sshll.u32 [#allocation2], 4
      %s18 = int_to_ptr.vmem [resolvable:$true] %s17
      %20 = dma.hbm_to_vmem [thread:$0]  %s0, 128, %s18, [#allocation3]
    $region5: #{tpu_custom_call.1} parent=1 // pred_fallthru
      _
    // Predicated region
    $region6: #{tpu_custom_call.1} parent=1 // pred_check
      _
    $region7: #{tpu_custom_call.1} parent=1 // pred_check_branch
      %22 = sbr.rel (0) target = $region9
    $region8: #{tpu_custom_call.1} parent=1 // pred_region
      %s24 = ssub.s32 512, 512
      %25 = vsyncadd [#allocation6], %s24
      %s26 = sshll.u32 [#allocation5], 4
      %s27 = int_to_ptr.vmem [resolvable:$true] %s26
      %32 = dma.hbm_to_vmem [thread:$0]  %s1, 512, %s27, [#allocation6], 128, 128, 8
    $region9: #{tpu_custom_call.1} parent=1 // pred_fallthru
      _
    // Predicated region
    $region10: #{tpu_custom_call.1} parent=1 // pred_check
      _
    $region11: #{tpu_custom_call.1} parent=1 // pred_check_branch
      %34 = sbr.rel (0) target = $region13
    $region12: #{tpu_custom_call.1} parent=1 // pred_region
      _
    $region13: #{tpu_custom_call.1} parent=1 // pred_fallthru
      _
    // Predicated region
    $region14: #{tpu_custom_call.1} parent=1 // pred_check
      _
    $region15: #{tpu_custom_call.1} parent=1 // pred_check_branch
      %36 = sbr.rel (0) target = $region17
    $region16: #{tpu_custom_call.1} parent=1 // pred_region
      %37 = dma.done [#allocation3], 128
    $region17: #{tpu_custom_call.1} parent=1 // pred_fallthru
      _
    // Predicated region
    $region18: #{tpu_custom_call.1} parent=1 // pred_check
      _
    $region19: #{tpu_custom_call.1} parent=1 // pred_check_branch
      %39 = sbr.rel (0) target = $region21
    $region20: #{tpu_custom_call.1} parent=1 // pred_region
      %40 = dma.done [#allocation6], 512
    $region21: #{tpu_custom_call.1} parent=1 // pred_fallthru
      _
    %v41 = vld [vmem:[#allocation2] sm:$0xff]
    %v42 = vld [vmem:[#allocation5] sm:$0xff]
    %v43 = vld [vmem:[#allocation5 + $0x8] sm:$0xff]
    %v44 = vld [vmem:[#allocation5 + $0x10] sm:$0xff]
    %v45 = vld [vmem:[#allocation5 + $0x18] sm:$0xff]
    %v46 = vld [vmem:[%s2] sm:$0x1]
    %v48 = vlaneseq
    %v49 = vshrl.u32 %v48, 7
    %v50 = vsub.s32 0, %v49
    %v51 = vrot.slane %v46, %v50
    %vm53 = vcmask 261120
    %v55 = vsel %vm53, %v41, 0
    %57 = vmatprep.subr.mxu0 0.0
    %58 = vmatpush1.msra.mxu0 %v42
    %59 = vmatprep.subr.mxu0 0.0
    %60 = vmatpush1.msra.mxu0 %v43
    %61 = vmatprep.subr.mxu0 0.0
    %62 = vmatpush1.msra.mxu0 %v44
    %63 = vmatprep.subr.mxu0 0.0
    %64 = vmatpush1.msra.mxu0 %v45
    %65 = vmatprep.subr.mxu0 0.0
    %66 = vmatpush1.msra.mxu0 0.0
    %67 = vmatprep.subr.mxu0 0.0
    %68 = vmatpush1.msra.mxu0 0.0
    %69 = vmatprep.subr.mxu0 0.0
    %70 = vmatpush1.msra.mxu0 0.0
    %71 = vmatprep.subr.mxu0 0.0
    %72 = vmatpush1.msra.mxu0 0.0
    %73 = vmatprep.subr.mxu0 0.0
    %74 = vmatpush1.msra.mxu0 0.0
    %75 = vmatprep.subr.mxu0 0.0
    %76 = vmatpush1.msra.mxu0 0.0
    %77 = vmatprep.subr.mxu0 0.0
    %78 = vmatpush1.msra.mxu0 0.0
    %79 = vmatprep.subr.mxu0 0.0
    %80 = vmatpush1.msra.mxu0 0.0
    %81 = vmatprep.subr.mxu0 0.0
    %82 = vmatpush1.msra.mxu0 0.0
    %83 = vmatprep.subr.mxu0 0.0
    %84 = vmatpush1.msra.mxu0 0.0
    %85 = vmatprep.subr.mxu0 0.0
    %86 = vmatpush1.msra.mxu0 0.0
    %87 = vmatprep.subr.mxu0 0.0
    %88 = vmatpush1.msra.mxu0 0.0
    %89 = vmatprep.subr.mxu0 0.0
    %90 = vmatpush1.msra.mxu0 0.0
    %91 = vmatprep.subr.mxu0 0.0
    %92 = vmatpush1.msra.mxu0 0.0
    %93 = vmatprep.subr.mxu0 0.0
    %94 = vmatpush1.msra.mxu0 0.0
    %95 = vmatprep.subr.mxu0 0.0
    %96 = vmatpush1.msra.mxu0 0.0
    %97 = vmatprep.subr.mxu0 0.0
    %98 = vmatpush1.msra.mxu0 0.0
    %99 = vmatprep.subr.mxu0 0.0
    %100 = vmatpush1.msra.mxu0 0.0
    %101 = vmatprep.subr.mxu0 0.0
    %102 = vmatpush1.msra.mxu0 0.0
    %103 = vmatprep.subr.mxu0 0.0
    %104 = vmatpush1.msra.mxu0 0.0
    %105 = vmatprep.subr.mxu0 0.0
    %106 = vmatpush1.msra.mxu0 0.0
    %107 = vmatprep.subr.mxu0 0.0
    %108 = vmatpush1.msra.mxu0 0.0
    %109 = vmatprep.subr.mxu0 0.0
    %110 = vmatpush1.msra.mxu0 0.0
    %111 = vmatprep.subr.mxu0 0.0
    %112 = vmatpush1.msra.mxu0 0.0
    %113 = vmatprep.subr.mxu0 0.0
    %114 = vmatpush1.msra.mxu0 0.0
    %115 = vmatprep.subr.mxu0 0.0
    %116 = vmatpush1.msra.mxu0 0.0
    %117 = vmatprep.subr.mxu0 0.0
    %118 = vmatpush1.msra.mxu0 0.0
    %119 = vmatprep.subr.mxu0 0.0
    %120 = vmatpush1.msra.mxu0 0.0
    %121 = vmatprep.mubr.f32.mxu0 0.0
    %122 = vmatmul.mubr.f32.gmra.mrb[0].mxu0 %v55
    %v123 = vpop.f32.mrb[0].mxu0
    %v124 = vadd.f32 %v51, %v123
    %v125 = vpop.f32.mrb[0].mxu0
    %126 = vdwg.mxu0
    %v127 = vmax.f32 %v124, 0.0
    %vm128 = vcmask 523264
    %129 = vst.msk [vmem:[#allocation7] sm:$0xff] %vm128, %v127
    // Predicated region
    $region22: #{tpu_custom_call.1} parent=1 // pred_check
      _
    $region23: #{tpu_custom_call.1} parent=1 // pred_check_branch
      %131 = sbr.rel (0) target = $region25
    $region24: #{tpu_custom_call.1} parent=1 // pred_region
      %s133 = ssub.s32 128, 128
      %134 = vsyncadd [#allocation4], %s133
      %s136 = sshll.u32 [#allocation7], 4
      %s137 = int_to_ptr.vmem [resolvable:$true] %s136
      %139 = dma.vmem_to_hbm [thread:$0]  %s137, 128, %s3, [#allocation4]
    $region25: #{tpu_custom_call.1} parent=1 // pred_fallthru
      _
    // Predicated region
    $region26: #{tpu_custom_call.1} parent=1 // pred_check
      _
    $region27: #{tpu_custom_call.1} parent=1 // pred_check_branch
      %141 = sbr.rel (0) target = $region29
    $region28: #{tpu_custom_call.1} parent=1 // pred_region
      %142 = dma.done [#allocation4], 128
    $region29: #{tpu_custom_call.1} parent=1 // pred_fallthru
      _
    %143 = vsyncpa [#allocation3], 1
    %144 = vsyncpa [#allocation6], 1
    %145 = vsyncpa [#allocation4], 1

</llo_original>
